<compile_context>
chip_gen: v7x
topology: tpu7x:2x2x1
jax: 0.10.0
libtpu: 0.0.40
codegen_flags: <defaults>
</compile_context>

<pallas_src>
import jax
import jax.numpy as jnp
from jax.experimental import pallas as pl
from jax.experimental.pallas import tpu as pltpu

H1 = 64      # hidden-1 width (nn.Linear(IN, 64))
H2 = 128     # hidden-2 width (nn.Linear(64, 128))
OUT = 1
NC = 2       # leading "parallel" grid axis: K split across (up to) 2 TensorCores


def _leaky_relu(x, slope=0.2):
    return jnp.where(x > 0, x, slope * x)


def _stable_sigmoid(x):
    z = jnp.exp(-jnp.abs(x))
    return jnp.where(x >= 0, 1.0 / (1.0 + z), z / (1.0 + z))


# ---------------------------------------------------------------------------
# Kernel 1: layer-1 matvec, K-tiled W1 streamed from HBM.
# grid = (NC, nk_per_core); axis 0 is "parallel" (dual-core on v7x), axis 1 is
# the K reduction.  Each core accumulates into its own (1,1,64) f32 output
# block, which stays resident across the k axis.
# ---------------------------------------------------------------------------
def layer1_partial_kernel(x_ref, w1_ref, part_ref):
    k = pl.program_id(1)

    @pl.when(k == 0)
    def _():
        part_ref[...] = jnp.zeros_like(part_ref)

    # (1, TK) bf16 @ (TK, 64) bf16 -> f32 partial.
    part_ref[...] += jnp.dot(
        x_ref[...], w1_ref[...], preferred_element_type=jnp.float32
    ).reshape(part_ref.shape)


# ---------------------------------------------------------------------------
# Kernel 2: tiny one-shot epilogue.  Sums the per-core partials, adds b1,
# LeakyReLU, layer 2 on the MXU, LeakyReLU, layer 3 as VPU multiply + lane
# reduction, stable sigmoid.
# ---------------------------------------------------------------------------
def epilogue_kernel(part_ref, b1_ref, w2_ref, b2_ref, w3t_ref, b3_ref, o_ref):
    h1 = b1_ref[...]
    for c in range(NC):                          # static unroll over partials
        h1 = h1 + part_ref[c]
    h1 = _leaky_relu(h1)
    # Dropout(0.1): identity in eval mode.

    # Layer 2: (1, 64) @ (64, 128) on the MXU.
    h2 = jnp.dot(h1.astype(w2_ref.dtype), w2_ref[...],
                 preferred_element_type=jnp.float32) + b2_ref[...]
    h2 = _leaky_relu(h2)
    # Dropout(0.1): identity in eval mode.

    # Layer 3 as VPU multiply + lane reduction (N=1 MXU matmul is wasteful).
    h3 = jnp.sum(h2 * w3t_ref[...], axis=-1, keepdims=True) + b3_ref[...]
    o_ref[...] = _stable_sigmoid(h3).astype(o_ref.dtype)


# ---------------------------------------------------------------------------
# Sizing helpers
# ---------------------------------------------------------------------------
def _pick_tk(in_feat, device_kind=None):
    """Per-generation K tile: the double-buffered W1 tile (lane-padded to 128
    lanes in VMEM) must fit the scoped-VMEM budget while each DMA stays large
    enough to hide the ~0.35us per-grid-step overhead."""
    if device_kind is None:
        try:
            device_kind = jax.devices()[0].device_kind
        except Exception:
            device_kind = ""
    kind = device_kind.lower()
    if "v5 lite" in kind or "v5e" in kind or "v5lite" in kind:
        target = 16384      # 4 MiB/buffer -> safe under v5e's 16 MiB default scope
    elif "v7" in kind:
        target = 65536      # 16 MiB/buffer; halves step count on ~3.2 TB/s HBM
    else:
        target = 32768      # v6e / default: 8 MiB/buffer
    tk = min(target, in_feat)
    return max(128, (tk // 128) * 128)


def _vmem_limit_bytes(tk):
    # W1 tile is lane-padded to 128 lanes in VMEM regardless of its 64 HBM
    # columns.  Allow double buffering + headroom; never exceed v7x's 64 MiB
    # physical VMEM.
    w1_tile = tk * 128 * 2          # bf16, lane-padded
    return int(min(48 << 20, max(32 << 20, 2 * w1_tile + (8 << 20))))


# ---------------------------------------------------------------------------
# Packing (one-time / offline) and forward
# ---------------------------------------------------------------------------
def pack_params(params, in_feat, tk, nc=NC):
    """W1 (K_pad, 64) / W2 (64, 128) in bf16 (no column padding), biases f32,
    W3 pre-transposed to a single lane row."""
    w1, b1, w2, b2, w3, b3 = params
    k_pad = pl.cdiv(in_feat, nc * tk) * nc * tk
    w1p = jnp.pad(w1.astype(jnp.bfloat16), ((0, k_pad - in_feat), (0, 0)))  # (K_pad, 64)
    b1p = b1.reshape(1, H1).astype(jnp.float32)                             # (1, 64)
    w2p = w2.astype(jnp.bfloat16)                                           # (64, 128)
    b2p = b2.reshape(1, H2).astype(jnp.float32)                             # (1, 128)
    w3t = w3.reshape(H2, OUT).T.astype(jnp.float32)                         # (1, 128)
    b3p = b3.reshape(1, OUT).astype(jnp.float32)                            # (1, 1)
    return (w1p, b1p, w2p, b2p, w3t, b3p)


def pack_input(img, k_pad):
    """Flatten to (1, -1) exactly like the PyTorch forward, cast to bf16 and
    zero-pad to the packed K length (done once, outside the per-call path)."""
    x = img.reshape(1, -1)
    return jnp.pad(x.astype(jnp.bfloat16), ((0, 0), (0, k_pad - x.shape[1])))


def discriminator_forward(xp, packed, tk, nc=NC):
    w1p, b1p, w2p, b2p, w3t, b3p = packed
    k_pad = w1p.shape[0]
    assert xp.shape == (1, k_pad)
    nk = k_pad // tk
    nk_per_core = nk // nc

    partials = pl.pallas_call(
        layer1_partial_kernel,
        out_shape=jax.ShapeDtypeStruct((nc, 1, H1), jnp.float32),
        grid_spec=pltpu.PrefetchScalarGridSpec(
            num_scalar_prefetch=0,
            grid=(nc, nk_per_core),
            in_specs=[
                # x slice for this core's K chunk
                pl.BlockSpec((1, tk), lambda c, k: (0, c * nk_per_core + k)),
                # W1 K tile (streamed, unpadded 64-wide in HBM)
                pl.BlockSpec((tk, H1), lambda c, k: (c * nk_per_core + k, 0)),
            ],
            out_specs=pl.BlockSpec((1, 1, H1), lambda c, k: (c, 0, 0)),
        ),
        compiler_params=pltpu.CompilerParams(
            dimension_semantics=("parallel", "arbitrary"),
            vmem_limit_bytes=_vmem_limit_bytes(tk)),
    )(xp, w1p)

    return pl.pallas_call(
        epilogue_kernel,
        out_shape=jax.ShapeDtypeStruct((1, OUT), jnp.float32),
        grid_spec=pltpu.PrefetchScalarGridSpec(
            num_scalar_prefetch=0,
            grid=(1,),
            in_specs=[
                pl.BlockSpec((nc, 1, H1), lambda i: (0, 0, 0)),  # partials
                pl.BlockSpec((1, H1),     lambda i: (0, 0)),     # b1
                pl.BlockSpec((H1, H2),    lambda i: (0, 0)),     # W2
                pl.BlockSpec((1, H2),     lambda i: (0, 0)),     # b2
                pl.BlockSpec((1, H2),     lambda i: (0, 0)),     # W3^T
                pl.BlockSpec((1, OUT),    lambda i: (0, 0)),     # b3
            ],
            out_specs=pl.BlockSpec((1, OUT), lambda i: (0, 0)),
        ),
        compiler_params=pltpu.CompilerParams(
            dimension_semantics=("arbitrary",)),
    )(partials, b1p, w2p, b2p, w3t, b3p)


def init_params(key, in_feat, h1=H1, h2=H2, out=OUT):
    """PyTorch-Linear-style init: U(-1/sqrt(fan_in), 1/sqrt(fan_in)).
    Weights stored as (in_features, out_features)."""
    ks = jax.random.split(key, 6)

    def lin(kw, kb, fan_in, fan_out):
        bound = 1.0 / jnp.sqrt(fan_in)
        w = jax.random.uniform(kw, (fan_in, fan_out), jnp.float32, -bound, bound)
        b = jax.random.uniform(kb, (fan_out,), jnp.float32, -bound, bound)
        return w, b

    w1, b1 = lin(ks[0], ks[1], in_feat, h1)
    w2, b2 = lin(ks[2], ks[3], h1, h2)
    w3, b3 = lin(ks[4], ks[5], h2, out)
    return (w1, b1, w2, b2, w3, b3)


if __name__ == "__main__":
    key = jax.random.PRNGKey(0)
    k_img, k_par = jax.random.split(key)

    # Small analog of the (3, 512, 512) input: (1, 3, 16, 16) NCHW image.
    # (At production size in_feat = 786432 and tk comes from _pick_tk.)
    C, H, W = 3, 16, 16
    img = jax.random.normal(k_img, (1, C, H, W), jnp.float32)
    in_feat = C * H * W

    params = init_params(k_par, in_feat=in_feat)

    # Small K tile here so the multi-step accumulation and the 2-way core split
    # are actually exercised at toy size (768 feats -> k_pad=1024 -> 2 "cores"
    # x 2 K steps).  Production would use tk = _pick_tk(in_feat).
    tk = min(_pick_tk(in_feat), 256)
    packed = pack_params(params, in_feat, tk)
    xp = pack_input(img, packed[0].shape[0])

    out = discriminator_forward(xp, packed, tk)
    jax.block_until_ready(out)

    # Pure-JAX reference mirroring the kernel's bf16 weight/activation
    # precision (eval-mode dropout = identity).
    w1, b1, w2, b2, w3, b3 = params
    hp = jax.lax.Precision.HIGHEST
    x = img.reshape(1, -1)
    xb = x.astype(jnp.bfloat16).astype(jnp.float32)
    w1f = w1.astype(jnp.bfloat16).astype(jnp.float32)
    r = jnp.dot(xb, w1f, precision=hp) + b1.reshape(1, -1)
    r = jnp.where(r > 0, r, 0.2 * r)
    rb = r.astype(jnp.bfloat16).astype(jnp.float32)
    w2f = w2.astype(jnp.bfloat16).astype(jnp.float32)
    r = jnp.dot(rb, w2f, precision=hp) + b2.reshape(1, -1)
    r = jnp.where(r > 0, r, 0.2 * r)
    r = jnp.dot(r, w3, precision=hp) + b3.reshape(1, -1)
    ref = 1.0 / (1.0 + jnp.exp(-r))

    assert out.shape == (1, OUT), out.shape
    assert jnp.allclose(out, ref, atol=1e-4, rtol=1e-4), (out, ref)

    print("KERNEL_OK")
</pallas_src>

<mosaic_0001>
module attributes {stable_mosaic.version = 11 : i64} {
  func.func @layer1_partial_kernel(%arg0: i32, %arg1: i32, %arg2: memref<1x256xbf16, #tpu.memory_space<vmem>>, %arg3: memref<256x64xbf16, #tpu.memory_space<vmem>>, %arg4: memref<1x1x64xf32, #tpu.memory_space<vmem>>) attributes {dimension_semantics = [#tpu.dimension_semantics<parallel>, #tpu.dimension_semantics<arbitrary>], iteration_bounds = array<i64: 2, 2>, scalar_prefetch = 0 : i64, scratch_operands = 0 : i64, tpu.core_type = #tpu.core_type<tc>, window_params = [{transform_indices = @transform_0, window_bounds = array<i64: 1, 256>}, {transform_indices = @transform_1, window_bounds = array<i64: 256, 64>}, {transform_indices = @transform_2, window_bounds = array<i64: 1, 1, 64>}]} {
    %c0_i32 = arith.constant 0 : i32
    %0 = arith.cmpi eq, %arg1, %c0_i32 : i32
    %1 = arith.extui %0 : i1 to i32
    %c0_i32_0 = arith.constant 0 : i32
    %2 = arith.cmpi ne, %1, %c0_i32_0 : i32
    scf.if %2 {
      %cst_10 = arith.constant 0.000000e+00 : f32
      %10 = vector.broadcast %cst_10 : f32 to vector<1x1x64xf32>
      %c0_11 = arith.constant 0 : index
      %c0_12 = arith.constant 0 : index
      %c0_13 = arith.constant 0 : index
      %11 = vector.load %arg4[%c0_11, %c0_12, %c0_13] : memref<1x1x64xf32, #tpu.memory_space<vmem>>, vector<1x1x64xf32>
      tpu.vector_store %arg4[%c0_11, %c0_12, %c0_13], %10 {strides = array<i32>} : memref<1x1x64xf32, #tpu.memory_space<vmem>>, vector<1x1x64xf32>,
    } else {
    }
    %c0 = arith.constant 0 : index
    %c0_1 = arith.constant 0 : index
    %c0_2 = arith.constant 0 : index
    %3 = vector.load %arg4[%c0, %c0_1, %c0_2] : memref<1x1x64xf32, #tpu.memory_space<vmem>>, vector<1x1x64xf32>
    %c0_3 = arith.constant 0 : index
    %c0_4 = arith.constant 0 : index
    %4 = vector.load %arg2[%c0_3, %c0_4] : memref<1x256xbf16, #tpu.memory_space<vmem>>, vector<1x256xbf16>
    %c0_5 = arith.constant 0 : index
    %c0_6 = arith.constant 0 : index
    %5 = vector.load %arg3[%c0_5, %c0_6] : memref<256x64xbf16, #tpu.memory_space<vmem>>, vector<256x64xbf16>
    %cst = arith.constant dense<0.000000e+00> : vector<1x64xf32>
    %6 = tpu.matmul %4, %5, %cst {dimension_numbers = #tpu.dot_dimension_numbers<[1], [0], [0], [1], [0, 0, 1, 1], [], []>} : vector<1x256xbf16>, vector<256x64xbf16>, vector<1x64xf32> -> vector<1x64xf32>
    %7 = vector.shape_cast %6 : vector<1x64xf32> to vector<1x1x64xf32>
    %8 = arith.addf %3, %7 : vector<1x1x64xf32>
    %c0_7 = arith.constant 0 : index
    %c0_8 = arith.constant 0 : index
    %c0_9 = arith.constant 0 : index
    %9 = vector.load %arg4[%c0_7, %c0_8, %c0_9] : memref<1x1x64xf32, #tpu.memory_space<vmem>>, vector<1x1x64xf32>
    tpu.vector_store %arg4[%c0_7, %c0_8, %c0_9], %8 {strides = array<i32>} : memref<1x1x64xf32, #tpu.memory_space<vmem>>, vector<1x1x64xf32>,
    return
  }
  func.func @transform_0(%arg0: i32, %arg1: i32) -> (i32, i32) {
    %c2_i32 = arith.constant 2 : i32
    %0 = arith.muli %arg0, %c2_i32 : i32
    %1 = arith.addi %0, %arg1 : i32
    %c0_i32 = arith.constant 0 : i32
    %c0_i32_0 = arith.constant 0 : i32
    return %c0_i32, %1 : i32, i32
  }
  func.func @transform_1(%arg0: i32, %arg1: i32) -> (i32, i32) {
    %c2_i32 = arith.constant 2 : i32
    %0 = arith.muli %arg0, %c2_i32 : i32
    %1 = arith.addi %0, %arg1 : i32
    %c0_i32 = arith.constant 0 : i32
    %c0_i32_0 = arith.constant 0 : i32
    return %1, %c0_i32 : i32, i32
  }
  func.func @transform_2(%arg0: i32, %arg1: i32) -> (i32, i32, i32) {
    %c0_i32 = arith.constant 0 : i32
    %c0_i32_0 = arith.constant 0 : i32
    %c0_i32_1 = arith.constant 0 : i32
    return %arg0, %c0_i32, %c0_i32_0 : i32, i32, i32
  }
}

</mosaic_0001>

<llo_original>
// kernel: tpu_custom_call.1
$region0: #{tpu_custom_call.1}
  #allocation0 [shape = 'u32[]', space=smem, size = 0x4, offset = 0x4, fixed_abs, tag = 'smem constant byte address 0x4 - core index']
  #allocation1 [shape = 'u32[144,128]{1,0:T(1,128)}', space=vmem, size = 0x12000, scoped, tag = 'internal scratch']
  %s0 = inlined_call_operand.vmem [shape: bf16[1,1024], index: 0, kind: input, shape index: {}]
  %s1 = inlined_call_operand.vmem [shape: bf16[1024,64], index: 1, kind: input, shape index: {}]
  %s2 = inlined_call_operand.hbm [shape: f32[2,1,64], index: 2, kind: output, shape index: {}]
  %s3 = sld [smem:[#allocation0]]
  $region45: #{tpu_custom_call.1} parent=0
    _
  %s5 = ssub.s32 1, %s3
  %s6 = scalar_select 0, %s5, %s3
  $region1: #{tpu_custom_call.1} parent=0
    #allocation2 [shape = 'u8[1024]{0}', space=vmem, size = 0x400, scoped, tag = 'output window, operand 0']
    #allocation3 [shape = 's32[2]{0}', space=sflag, size = 0x8, scoped, tag = 'scoped memory for tpu_custom_call.1']
    %7 = vsyncpa [#allocation3], 0
    %s8 = scalar_lea.sflag [#allocation3], 1
    %9 = vsyncpa %s8, 0
    loop: start=0, step=1, limit=6
    $region2: #{tpu_custom_call.1} parent=1 // loop_pre_header
      _
    $region3: #{tpu_custom_call.1} parent=1 // loop_header
      %s11 = sphi 0, %s15
      %p12 = scmp.ge.s32.totalorder %s11, 6
      %s18 = sphi 0, %s30
      %s19 = sphi 0, %s26
      %s20 = sphi 0, %s18
      %s21 = sphi 0, %s19
      %s22 = sphi 0, %s20
      %s23 = sphi 0, %s21
      %s37 = sphi 0, %s39
      %s40 = sphi 0, %s37
      %s41 = sphi 0, %s40
      %s57 = sphi 0, %s41
      %s67 = sphi 0, %s69
      %s70 = sphi 0, %s67
      %s71 = sphi 0, %s70
      %s87 = sphi 0, %s71
      %s93 = sphi 0, %s95
      %s96 = sphi 0, %s93
      %s97 = sphi 0, %s96
      %s113 = sphi 0, %s97
    $region4: #{tpu_custom_call.1} parent=1 // loop_header_branch
      %14 = sbr.rel (%p12) target = $region8
    $region5: #{tpu_custom_call.1} parent=1 // loop_body
      %s16 = ssub.s32 %s11, 1
      %s17 = ssub.s32 %s11, 2
      %s24 = sadd.s32 1, %s19
      %p25 = scmp.ge.s32.totalorder %s24, 2
      %s26 = scalar_select %p25, 0, %s24
      %s27 = sadd.s32 1, %s18
      %s28 = scalar_select %p25, %s27, %s18
      %p29 = scmp.ge.s32.totalorder %s28, 2
      %s30 = scalar_select %p29, 0, %s28
      %s31 = smul.u32 %s18, 2
      %s32 = sadd.s32 %s31, %s19
      %s33 = smul.u32 %s30, 2
      %s34 = sadd.s32 %s33, %s26
      %s35 = ssub.s32 %s32, %s34
      %p36 = scmp.eq.s32.totalorder %s35, 0
      %s38 = sadd.s32 %s37, 1
      %s39 = scalar_select %p36, %s37, %s38
      %p42 = pneg %p36
      %p43 = scmp.eq.s32.totalorder %s11, 3
      %p44 = por %p42, %p43
      %p45 = scmp.ne.s32.totalorder %s37, %s40
      %p46 = scmp.eq.s32.totalorder %s11, 0
      %p47 = por %p45, %p46
      %p48 = scmp.ne.s32.totalorder %s37, %s40
      %p49 = scmp.eq.s32.totalorder %s16, 3
      %p50 = por %p48, %p49
      %p51 = scmp.ne.s32.totalorder %s40, %s41
      %p52 = scmp.eq.s32.totalorder %s16, 0
      %p53 = por %p51, %p52
      %p54 = scmp.ne.s32.totalorder %s40, %s41
      %p55 = scmp.eq.s32.totalorder %s17, 3
      %p56 = por %p54, %p55
      %p58 = scmp.ne.s32.totalorder %s41, %s57
      %p59 = scmp.eq.s32.totalorder %s17, 0
      %p60 = por %p58, %p59
      %s61 = smul.u32 %s18, 2
      %s62 = sadd.s32 %s61, %s19
      %s63 = smul.u32 %s30, 2
      %s64 = sadd.s32 %s63, %s26
      %s65 = ssub.s32 %s62, %s64
      %p66 = scmp.eq.s32.totalorder %s65, 0
      %s68 = sadd.s32 %s67, 1
      %s69 = scalar_select %p66, %s67, %s68
      %p72 = pneg %p66
      %p73 = scmp.eq.s32.totalorder %s11, 3
      %p74 = por %p72, %p73
      %p75 = scmp.ne.s32.totalorder %s67, %s70
      %p76 = scmp.eq.s32.totalorder %s11, 0
      %p77 = por %p75, %p76
      %p78 = scmp.ne.s32.totalorder %s67, %s70
      %p79 = scmp.eq.s32.totalorder %s16, 3
      %p80 = por %p78, %p79
      %p81 = scmp.ne.s32.totalorder %s70, %s71
      %p82 = scmp.eq.s32.totalorder %s16, 0
      %p83 = por %p81, %p82
      %p84 = scmp.ne.s32.totalorder %s70, %s71
      %p85 = scmp.eq.s32.totalorder %s17, 3
      %p86 = por %p84, %p85
      %p88 = scmp.ne.s32.totalorder %s71, %s87
      %p89 = scmp.eq.s32.totalorder %s17, 0
      %p90 = por %p88, %p89
      %s91 = ssub.s32 %s18, %s30
      %p92 = scmp.eq.s32.totalorder %s91, 0
      %s94 = sadd.s32 %s93, 1
      %s95 = scalar_select %p92, %s93, %s94
      %p98 = pneg %p92
      %p99 = scmp.eq.s32.totalorder %s11, 3
      %p100 = por %p98, %p99
      %p101 = scmp.ne.s32.totalorder %s93, %s96
      %p102 = scmp.eq.s32.totalorder %s11, 0
      %p103 = por %p101, %p102
      %p104 = scmp.ne.s32.totalorder %s93, %s96
      %p105 = scmp.eq.s32.totalorder %s16, 3
      %p106 = por %p104, %p105
      %p107 = scmp.ne.s32.totalorder %s96, %s97
      %p108 = scmp.eq.s32.totalorder %s16, 0
      %p109 = por %p107, %p108
      %p110 = scmp.ne.s32.totalorder %s96, %s97
      %p111 = scmp.eq.s32.totalorder %s17, 3
      %p112 = por %p110, %p111
      %p114 = scmp.ne.s32.totalorder %s97, %s113
      %p115 = scmp.eq.s32.totalorder %s17, 0
      %p116 = por %p114, %p115
      %p117 = scmp.le.s32.totalorder 1, %s11
      %p118 = scmp.lt.s32.totalorder %s11, 5
      %p119 = pnand %p117, %p118
      %p120 = pneg %p119
      // Predicated region
      $region9: #{tpu_custom_call.1} parent=5 // pred_check
        _
      $region10: #{tpu_custom_call.1} parent=5 // pred_check_branch
        %122 = sbr.rel (%p119) target = $region12
      $region11: #{tpu_custom_call.1} parent=5 // pred_region
        %s123 = ssub.s32 %s11, 1
      $region12: #{tpu_custom_call.1} parent=5 // pred_fallthru
        _
      %p124 = scmp.lt.s32.totalorder %s11, 4
      // Predicated region
      $region13: #{tpu_custom_call.1} parent=5 // pred_check
        %p125 = pneg %p124
      $region14: #{tpu_custom_call.1} parent=5 // pred_check_branch
        %127 = sbr.rel (%p125) target = $region16
      $region15: #{tpu_custom_call.1} parent=5 // pred_region
        // Predicated region
        $region17: #{tpu_custom_call.1} parent=15 // pred_check
          %p128 = pneg %p47
        $region18: #{tpu_custom_call.1} parent=15 // pred_check_branch
          %130 = sbr.rel (%p128) target = $region20
        $region19: #{tpu_custom_call.1} parent=15 // pred_region
          %s131 = smul.u32 %s18, 2
          %s132 = sadd.s32 %s131, %s19
          %s133 = smul.u32 2, %s132
          %p134 = scmp.lt.s32.totalorder %s133, 7
          %s135 = scalar_select %p134, %s133, 7
          %s136 = scalar_lea.vmem %s0, %s135
          %s137 = smul.u32 %s18, 2
          %s138 = sadd.s32 %s137, %s19
          %s139 = smul.u32 2, %s138
        $region20: #{tpu_custom_call.1} parent=15 // pred_fallthru
          _
        // Predicated region
        $region21: #{tpu_custom_call.1} parent=15 // pred_check
          %p140 = pneg %p77
        $region22: #{tpu_custom_call.1} parent=15 // pred_check_branch
          %142 = sbr.rel (%p140) target = $region24
        $region23: #{tpu_custom_call.1} parent=15 // pred_region
          %s143 = smul.u32 %s18, 2
          %s144 = sadd.s32 %s143, %s19
          %s145 = smul.u32 32, %s144
          %p146 = scmp.lt.s32.totalorder %s145, 127
          %s147 = scalar_select %p146, %s145, 127
          %s148 = smul.addr %s147, 4
          %s149 = scalar_lea.vmem %s1, %s148
          %s150 = smul.u32 %s18, 2
          %s151 = sadd.s32 %s150, %s19
          %s152 = smul.u32 32, %s151
        $region24: #{tpu_custom_call.1} parent=15 // pred_fallthru
          _
      $region16: #{tpu_custom_call.1} parent=5 // pred_fallthru
        _
      %p153 = scmp.le.s32.totalorder 1, %s11
      %p154 = scmp.lt.s32.totalorder %s11, 5
      %p155 = pnand %p153, %p154
      %p156 = pneg %p155
      // Predicated region
      $region25: #{tpu_custom_call.1} parent=5 // pred_check
        _
      $region26: #{tpu_custom_call.1} parent=5 // pred_check_branch
        %158 = sbr.rel (%p155) target = $region28
      $region27: #{tpu_custom_call.1} parent=5 // pred_region
        %s159 = ssub.s32 %s11, 1
        %s160 = smul.u32 %s20, 2
        %s161 = sadd.s32 %s160, %s21
        %s162 = smul.u32 2, %s161
        %p163 = scmp.lt.s32.totalorder %s162, 7
        %s164 = scalar_select %p163, %s162, 7
        %s165 = scalar_lea.vmem %s0, %s164
        %p166 = pneg %p53
        %p167 = pneg %p50
        %s168 = smul.u32 %s20, 2
        %s169 = sadd.s32 %s168, %s21
        %s170 = smul.u32 32, %s169
        %p171 = scmp.lt.s32.totalorder %s170, 127
        %s172 = scalar_select %p171, %s170, 127
        %s173 = smul.addr %s172, 4
        %s174 = scalar_lea.vmem %s1, %s173
        %p175 = pneg %p83
        %p176 = pneg %p80
        %p177 = pneg %p109
        %p178 = pneg %p106
        %s179 = sand.u32 %s96, 1
        %s180 = scalar_lea.sflag [#allocation3], %s179
        %s181 = sand.u32 %s96, 1
        %s182 = scalar_lea.vmem [#allocation2], %s181
        %s183 = smul.u32 %s20, 2
        %s184 = sadd.s32 %s183, %s21
        %s185 = smul.u32 2, %s184
        %p186 = scmp.lt.s32.totalorder %s185, 7
        %s187 = scalar_select %p186, %s185, 7
        %s188 = scalar_lea.vmem %s0, %s187
        %s189 = smul.u32 %s20, 2
        %s190 = sadd.s32 %s189, %s21
        %s191 = smul.u32 2, %s190
        %s192 = smul.u32 %s20, 2
        %s193 = sadd.s32 %s192, %s21
        %s194 = smul.u32 32, %s193
        %p195 = scmp.lt.s32.totalorder %s194, 127
        %s196 = scalar_select %p195, %s194, 127
        %s197 = smul.addr %s196, 4
        %s198 = scalar_lea.vmem %s1, %s197
        %s199 = smul.u32 %s20, 2
        %s200 = sadd.s32 %s199, %s21
        %s201 = smul.u32 32, %s200
        %p203 = scmp.eq.s32.totalorder %s21, 0
        // Predicated region
        $region29: #{tpu_custom_call.1} parent=27 // pred_check
          %p204 = pneg %p203
        $region30: #{tpu_custom_call.1} parent=27 // pred_check_branch
          %206 = sbr.rel (%p204) target = $region32
        $region31: #{tpu_custom_call.1} parent=27 // pred_region
          %vm207 = vcmask 516096
          %208 = vst.msk [vmem:[%s182] sm:$0x1] %vm207, 0.0
        $region32: #{tpu_custom_call.1} parent=27 // pred_fallthru
          _
        %v209 = vld [vmem:[%s182] sm:$0x1]
        %v210 = vld [vmem:[%s188] sm:$0x3]
        %v211 = vld [vmem:[%s198] sm:$0xf]
        %v212 = vld [vmem:[%s198 + $0x4] sm:$0xf]
        %v213 = vld [vmem:[%s198 + $0x8] sm:$0xf]
        %v214 = vld [vmem:[%s198 + $0xc] sm:$0xf]
        %v215 = vld [vmem:[%s198 + $0x10] sm:$0xf]
        %v216 = vld [vmem:[%s198 + $0x14] sm:$0xf]
        %v217 = vld [vmem:[%s198 + $0x18] sm:$0xf]
        %v218 = vld [vmem:[%s198 + $0x1c] sm:$0xf]
        %v219 = vld [vmem:[%s198 + $0x20] sm:$0xf]
        %v220 = vld [vmem:[%s198 + $0x24] sm:$0xf]
        %v221 = vld [vmem:[%s198 + $0x28] sm:$0xf]
        %v222 = vld [vmem:[%s198 + $0x2c] sm:$0xf]
        %v223 = vld [vmem:[%s198 + $0x30] sm:$0xf]
        %v224 = vld [vmem:[%s198 + $0x34] sm:$0xf]
        %v225 = vld [vmem:[%s198 + $0x38] sm:$0xf]
        %v226 = vld [vmem:[%s198 + $0x3c] sm:$0xf]
        %v227 = vld [vmem:[%s198 + $0x40] sm:$0xf]
        %v228 = vld [vmem:[%s198 + $0x44] sm:$0xf]
        %v229 = vld [vmem:[%s198 + $0x48] sm:$0xf]
        %v230 = vld [vmem:[%s198 + $0x4c] sm:$0xf]
        %v231 = vld [vmem:[%s198 + $0x50] sm:$0xf]
        %v232 = vld [vmem:[%s198 + $0x54] sm:$0xf]
        %v233 = vld [vmem:[%s198 + $0x58] sm:$0xf]
        %v234 = vld [vmem:[%s198 + $0x5c] sm:$0xf]
        %v235 = vld [vmem:[%s198 + $0x60] sm:$0xf]
        %v236 = vld [vmem:[%s198 + $0x64] sm:$0xf]
        %v237 = vld [vmem:[%s198 + $0x68] sm:$0xf]
        %v238 = vld [vmem:[%s198 + $0x6c] sm:$0xf]
        %v239 = vld [vmem:[%s198 + $0x70] sm:$0xf]
        %v240 = vld [vmem:[%s198 + $0x74] sm:$0xf]
        %v241 = vld [vmem:[%s198 + $0x78] sm:$0xf]
        %v242 = vld [vmem:[%s198 + $0x7c] sm:$0xf]
        %v245 = vunpack.c.l.s4 1966171168
        %v246 = vunpack.c.0.s8 %v245
        %v247 = vlaneseq
        %v248 = vshrl.u32 %v247, 7
        %v249 = vsub.s32 %v246, %v248
        %v250 = vrot.slane %v210, %v249
        %v251 = vcombine.high %v250, %v250
        %v253 = vunpack.c.l.s4 1966171168
        %v254 = vunpack.c.0.s8 %v253
        %v255 = vlaneseq
        %v256 = vshrl.u32 %v255, 7
        %v257 = vsub.s32 %v254, %v256
        %v258 = vrot.slane %v250, %v257
        %v260 = vunpack.c.l.s4 1966171168
        %v261 = vunpack.c.0.s8 %v260
        %v262 = vlaneseq
        %v263 = vshrl.u32 %v262, 7
        %v264 = vsub.s32 %v261, %v263
        %v265 = vrot.slane %v251, %v264
        %v300 = vunpack.c.l.b16 %v211
        %v301 = vunpack.c.l.b16 %v212
        %v302 = vunpack.c.l.b16 %v213
        %v303 = vunpack.c.l.b16 %v214
        %v304 = vunpack.c.l.b16 %v215
        %v305 = vunpack.c.l.b16 %v216
        %v306 = vunpack.c.l.b16 %v217
        %v307 = vunpack.c.l.b16 %v218
        %v308 = vunpack.c.l.b16 %v219
        %v309 = vunpack.c.l.b16 %v220
        %v310 = vunpack.c.l.b16 %v221
        %v311 = vunpack.c.l.b16 %v222
        %v312 = vunpack.c.l.b16 %v223
        %v313 = vunpack.c.l.b16 %v224
        %v314 = vunpack.c.l.b16 %v225
        %v315 = vunpack.c.l.b16 %v226
        %v316 = vunpack.c.l.b16 %v227
        %v317 = vunpack.c.l.b16 %v228
        %v318 = vunpack.c.l.b16 %v229
        %v319 = vunpack.c.l.b16 %v230
        %v320 = vunpack.c.l.b16 %v231
        %v321 = vunpack.c.l.b16 %v232
        %v322 = vunpack.c.l.b16 %v233
        %v323 = vunpack.c.l.b16 %v234
        %v324 = vunpack.c.l.b16 %v235
        %v325 = vunpack.c.l.b16 %v236
        %v326 = vunpack.c.l.b16 %v237
        %v327 = vunpack.c.l.b16 %v238
        %v328 = vunpack.c.l.b16 %v239
        %v329 = vunpack.c.l.b16 %v240
        %v330 = vunpack.c.l.b16 %v241
        %v331 = vunpack.c.l.b16 %v242
        %v332 = vpack.c.b16 %v301, %v300
        %v333 = vpack.c.b16 %v303, %v302
        %v334 = vpack.c.b16 %v305, %v304
        %v335 = vpack.c.b16 %v307, %v306
        %v336 = vpack.c.b16 %v309, %v308
        %v337 = vpack.c.b16 %v311, %v310
        %v338 = vpack.c.b16 %v313, %v312
        %v339 = vpack.c.b16 %v315, %v314
        %v340 = vpack.c.b16 %v317, %v316
        %v341 = vpack.c.b16 %v319, %v318
        %v342 = vpack.c.b16 %v321, %v320
        %v343 = vpack.c.b16 %v323, %v322
        %v344 = vpack.c.b16 %v325, %v324
        %v345 = vpack.c.b16 %v327, %v326
        %v346 = vpack.c.b16 %v329, %v328
        %v347 = vpack.c.b16 %v331, %v330
        %364 = vmatprep.subr.bf16.mxu0 0
        %365 = vmatpush1.bf16.msra.mxu0 %v332
        %366 = vmatprep.subr.bf16.mxu0 0
        %367 = vmatpush1.bf16.msra.mxu0 %v333
        %368 = vmatprep.subr.bf16.mxu0 0
        %369 = vmatpush1.bf16.msra.mxu0 %v334
        %370 = vmatprep.subr.bf16.mxu0 0
        %371 = vmatpush1.bf16.msra.mxu0 %v335
        %372 = vmatprep.subr.bf16.mxu0 0
        %373 = vmatpush1.bf16.msra.mxu0 %v336
        %374 = vmatprep.subr.bf16.mxu0 0
        %375 = vmatpush1.bf16.msra.mxu0 %v337
        %376 = vmatprep.subr.bf16.mxu0 0
        %377 = vmatpush1.bf16.msra.mxu0 %v338
        %378 = vmatprep.subr.bf16.mxu0 0
        %379 = vmatpush1.bf16.msra.mxu0 %v339
        %380 = vmatprep.subr.bf16.mxu0 0
        %381 = vmatpush1.bf16.msra.mxu0 %v340
        %382 = vmatprep.subr.bf16.mxu0 0
        %383 = vmatpush1.bf16.msra.mxu0 %v341
        %384 = vmatprep.subr.bf16.mxu0 0
        %385 = vmatpush1.bf16.msra.mxu0 %v342
        %386 = vmatprep.subr.bf16.mxu0 0
        %387 = vmatpush1.bf16.msra.mxu0 %v343
        %388 = vmatprep.subr.bf16.mxu0 0
        %389 = vmatpush1.bf16.msra.mxu0 %v344
        %390 = vmatprep.subr.bf16.mxu0 0
        %391 = vmatpush1.bf16.msra.mxu0 %v345
        %392 = vmatprep.subr.bf16.mxu0 0
        %393 = vmatpush1.bf16.msra.mxu0 %v346
        %394 = vmatprep.subr.bf16.mxu0 0
        %395 = vmatpush1.bf16.msra.mxu0 %v347
        %396 = vmatprep.mubr.bf16.mxu0 %v265
        %397 = vmatmul.mubr.bf16.gmra.mrb[0].mxu0 %v258
        %v398 = vpop.f32.mrb[0].mxu0
        %v399 = vadd.f32 0.0, %v398
        %v400 = vpop.f32.mrb[0].mxu0
        %v401 = vpop.f32.mrb[0].mxu0
        %v402 = vpop.f32.mrb[0].mxu0
        %403 = vdwg.mxu0
        %v404 = vadd.f32 %v209, %v399
        %vm405 = vcmask 516096
        %406 = vst.msk [vmem:[%s182] sm:$0x1] %vm405, %v404
        %s407 = sand.u32 %s96, 1
        %s408 = scalar_lea.sflag [#allocation3], %s407
        %s409 = sand.u32 %s96, 1
        %s410 = scalar_lea.vmem [#allocation2], %s409
        // Predicated region
        $region33: #{tpu_custom_call.1} parent=27 // pred_check
          %p411 = pneg %p106
        $region34: #{tpu_custom_call.1} parent=27 // pred_check_branch
          %413 = sbr.rel (%p411) target = $region36
        $region35: #{tpu_custom_call.1} parent=27 // pred_region
          %s415 = ssub.s32 16, 16
          %416 = vsyncadd %s408, %s415
          %s417 = smul.addr %s20, 16
          %s418 = scalar_lea.hbm %s2, %s417
          %s420 = sshll.u32 %s410, 4
          %s421 = int_to_ptr.vmem [resolvable:$true] %s420
          %423 = dma.vmem_to_hbm [thread:$0]  %s421, 16, %s418, %s408
        $region36: #{tpu_custom_call.1} parent=27 // pred_fallthru
          _
      $region28: #{tpu_custom_call.1} parent=5 // pred_fallthru
        _
      %p424 = scmp.le.s32.totalorder 2, %s11
      // Predicated region
      $region37: #{tpu_custom_call.1} parent=5 // pred_check
        %p425 = pneg %p424
      $region38: #{tpu_custom_call.1} parent=5 // pred_check_branch
        %427 = sbr.rel (%p425) target = $region40
      $region39: #{tpu_custom_call.1} parent=5 // pred_region
        %s428 = ssub.s32 %s11, 2
        // Predicated region
        $region41: #{tpu_custom_call.1} parent=39 // pred_check
          %p429 = pneg %p112
        $region42: #{tpu_custom_call.1} parent=39 // pred_check_branch
          %431 = sbr.rel (%p429) target = $region44
        $region43: #{tpu_custom_call.1} parent=39 // pred_region
          %s432 = sand.u32 %s97, 1
          %s433 = scalar_lea.sflag [#allocation3], %s432
          %s434 = sand.u32 %s97, 1
          %s435 = scalar_lea.vmem [#allocation2], %s434
          %436 = dma.done %s433, 16
        $region44: #{tpu_custom_call.1} parent=39 // pred_fallthru
          _
      $region40: #{tpu_custom_call.1} parent=5 // pred_fallthru
        _
    $region6: #{tpu_custom_call.1} parent=1 // loop_footer
      %s15 = sadd.s32 1, %s11
    $region7: #{tpu_custom_call.1} parent=1 // loop_footer_branch
      %10 = sbr.rel target = $region3
    $region8: #{tpu_custom_call.1} parent=1 // loop_exit
      _
    %437 = vsyncpa [#allocation3], 1
    %s438 = scalar_lea.sflag [#allocation3], 1
    %439 = vsyncpa %s438, 1

</llo_original>
